<compile_context>
chip_gen: v5e
topology: v5e:2x2
jax: 0.10.0
libtpu: 0.0.40
codegen_flags: <defaults>
</compile_context>

<pallas_src>
import functools

import jax
import jax.numpy as jnp
from jax.experimental import pallas as pl
from jax.experimental.pallas import tpu as pltpu

# MNIST 3-layer MLP dims from the classic sample_weight.pkl
D_IN, D_H1, D_H2, D_OUT = 784, 50, 100, 10

COMPUTE_DTYPE = jnp.bfloat16  # MXU input dtype; accumulation stays float32


def _sigmoid(x):
    # sigmoid(x) = 0.5 * (tanh(x / 2) + 1): one EUP tanh, no f32 VPU divide.
    return 0.5 * (jnp.tanh(0.5 * x) + 1.0)


def mlp_kernel(x_ref, w1_ref, b1_ref, w2_ref, b2_ref, w3_ref, b3_ref, y_ref):
    # a1 = x @ W1 + b1 ; z1 = sigmoid(a1)
    a1 = jnp.dot(x_ref[...], w1_ref[...],
                 preferred_element_type=jnp.float32) + b1_ref[...]
    z1 = _sigmoid(a1).astype(w2_ref.dtype)
    # a2 = z1 @ W2 + b2 ; z2 = sigmoid(a2)
    a2 = jnp.dot(z1, w2_ref[...],
                 preferred_element_type=jnp.float32) + b2_ref[...]
    z2 = _sigmoid(a2).astype(w3_ref.dtype)
    # a3 = z2 @ W3 + b3 ; y = softmax(a3) over classes.
    # Exact reciprocal keeps sum-to-1 tight; on a (TB, 10) tile the extra VPU
    # cost is negligible (output bytes are ~1% of input bytes).
    a3 = jnp.dot(z2, w3_ref[...],
                 preferred_element_type=jnp.float32) + b3_ref[...]
    m = jnp.max(a3, axis=-1, keepdims=True)
    e = jnp.exp(a3 - m)
    y_ref[...] = e * pl.reciprocal(jnp.sum(e, axis=-1, keepdims=True))


def prepare_params(W1, b1, W2, b2, W3, b3):
    """One-time weight prep (model-load time, not per forward call)."""
    return (
        W1.astype(COMPUTE_DTYPE),
        b1.reshape(1, D_H1).astype(jnp.float32),
        W2.astype(COMPUTE_DTYPE),
        b2.reshape(1, D_H2).astype(jnp.float32),
        W3.astype(COMPUTE_DTYPE),
        b3.reshape(1, D_OUT).astype(jnp.float32),
    )


@functools.partial(jax.jit, static_argnames=("tb",))
def neuralnet_forward(x, params, *, tb=1024):
    """Pallas forward pass equivalent to NeuralNet.forward."""
    W1, b1, W2, b2, W3, b3 = params
    B = x.shape[0]
    x = x.astype(COMPUTE_DTYPE)  # x.float(), then bf16 for the MXU input stream

    # Batch-tile size: multiple of 8 (sublane rule) unless it covers the whole
    # batch. TB=1024 keeps the double-buffered x tiles at ~3.2 MiB (bf16),
    # safely under every generation's scoped-VMEM limit; weights (~90 KiB)
    # stay resident.
    TB = min(tb, B)
    if TB < B:
        TB = max(8, (TB // 8) * 8)
    grid = (pl.cdiv(B, TB),)

    const = lambda shape: pl.BlockSpec(shape, lambda i: (0, 0))
    return pl.pallas_call(
        mlp_kernel,
        out_shape=jax.ShapeDtypeStruct((B, D_OUT), jnp.float32),
        grid=grid,
        in_specs=[
            pl.BlockSpec((TB, D_IN), lambda i: (i, 0)),   # x: streamed per tile
            const((D_IN, D_H1)),                          # W1 (VMEM-resident)
            const((1, D_H1)),                             # b1
            const((D_H1, D_H2)),                          # W2
            const((1, D_H2)),                             # b2
            const((D_H2, D_OUT)),                         # W3
            const((1, D_OUT)),                            # b3
        ],
        out_specs=pl.BlockSpec((TB, D_OUT), lambda i: (i, 0)),
        compiler_params=pltpu.CompilerParams(
            dimension_semantics=("parallel",),   # megacore sharding on v7x
            vmem_limit_bytes=32 * 1024 * 1024,
        ),
    )(x, W1, b1, W2, b2, W3, b3)


def _reference_forward(x, W1, b1, W2, b2, W3, b3):
    # Pure-JAX float32 reference mirroring the PyTorch forward.
    a1 = x.astype(jnp.float32) @ W1 + b1
    z1 = 1.0 / (1.0 + jnp.exp(-a1))
    a2 = z1 @ W2 + b2
    z2 = 1.0 / (1.0 + jnp.exp(-a2))
    a3 = z2 @ W3 + b3
    m = jnp.max(a3, axis=-1, keepdims=True)
    e = jnp.exp(a3 - m)
    return e / jnp.sum(e, axis=-1, keepdims=True)


if __name__ == "__main__":
    key = jax.random.PRNGKey(0)
    kx, k1, k2, k3, kb1, kb2, kb3 = jax.random.split(key, 7)

    # Deterministic synthetic parameters (sample_weight.pkl shapes).
    # TODO(synk): original module loads a pickled checkpoint; weights are
    # synthesized here instead.
    W1 = jax.random.normal(k1, (D_IN, D_H1), jnp.float32) * 0.1
    W2 = jax.random.normal(k2, (D_H1, D_H2), jnp.float32) * 0.1
    W3 = jax.random.normal(k3, (D_H2, D_OUT), jnp.float32) * 0.1
    b1 = jax.random.normal(kb1, (D_H1,), jnp.float32) * 0.01
    b2 = jax.random.normal(kb2, (D_H2,), jnp.float32) * 0.01
    b3 = jax.random.normal(kb3, (D_OUT,), jnp.float32) * 0.01

    params = prepare_params(W1, b1, W2, b2, W3, b3)

    # Case 1: small batch, single tile (grid = 1).
    B = 8
    x = jax.random.normal(kx, (B, D_IN), jnp.float32)
    y = jax.block_until_ready(neuralnet_forward(x, params))
    y_ref = _reference_forward(x, W1, b1, W2, b2, W3, b3)
    assert y.shape == (B, D_OUT)
    # bf16 MXU inputs -> compare against the f32 reference with a loose bound.
    assert jnp.allclose(y, y_ref, atol=2e-2, rtol=2e-2)
    # Softmax math runs in f32 with an exact reciprocal -> rows sum to 1.
    assert jnp.allclose(jnp.sum(y, axis=-1), jnp.ones((B,)), atol=1e-4)

    # Case 2: exercise batch tiling + the parallel grid axis (grid = 4).
    B2 = 32
    x2 = jax.random.normal(kx, (B2, D_IN), jnp.float32)
    y2 = jax.block_until_ready(neuralnet_forward(x2, params, tb=8))
    y2_ref = _reference_forward(x2, W1, b1, W2, b2, W3, b3)
    assert y2.shape == (B2, D_OUT)
    assert jnp.allclose(y2, y2_ref, atol=2e-2, rtol=2e-2)
    assert jnp.allclose(jnp.sum(y2, axis=-1), jnp.ones((B2,)), atol=1e-4)

    print("KERNEL_OK")
</pallas_src>

<mosaic_0001>
module attributes {stable_mosaic.version = 11 : i64} {
  func.func @mlp_kernel(%arg0: i32, %arg1: memref<8x784xbf16, #tpu.memory_space<vmem>>, %arg2: memref<784x50xbf16, #tpu.memory_space<vmem>>, %arg3: memref<1x50xf32, #tpu.memory_space<vmem>>, %arg4: memref<50x100xbf16, #tpu.memory_space<vmem>>, %arg5: memref<1x100xf32, #tpu.memory_space<vmem>>, %arg6: memref<100x10xbf16, #tpu.memory_space<vmem>>, %arg7: memref<1x10xf32, #tpu.memory_space<vmem>>, %arg8: memref<8x10xf32, #tpu.memory_space<vmem>>) attributes {dimension_semantics = [#tpu.dimension_semantics<parallel>], iteration_bounds = array<i64: 1>, scalar_prefetch = 0 : i64, scratch_operands = 0 : i64, tpu.core_type = #tpu.core_type<tc>, window_params = [{transform_indices = @transform_0, window_bounds = array<i64: 8, 784>}, {pipeline_mode = #tpu.pipeline_mode<synchronous>, transform_indices = @transform_1, window_bounds = array<i64: 784, 50>}, {pipeline_mode = #tpu.pipeline_mode<synchronous>, transform_indices = @transform_2, window_bounds = array<i64: 1, 50>}, {pipeline_mode = #tpu.pipeline_mode<synchronous>, transform_indices = @transform_3, window_bounds = array<i64: 50, 100>}, {pipeline_mode = #tpu.pipeline_mode<synchronous>, transform_indices = @transform_4, window_bounds = array<i64: 1, 100>}, {pipeline_mode = #tpu.pipeline_mode<synchronous>, transform_indices = @transform_5, window_bounds = array<i64: 100, 10>}, {pipeline_mode = #tpu.pipeline_mode<synchronous>, transform_indices = @transform_6, window_bounds = array<i64: 1, 10>}, {transform_indices = @transform_7, window_bounds = array<i64: 8, 10>}]} {
    %c0 = arith.constant 0 : index
    %c0_0 = arith.constant 0 : index
    %0 = vector.load %arg1[%c0, %c0_0] : memref<8x784xbf16, #tpu.memory_space<vmem>>, vector<8x784xbf16>
    %c0_1 = arith.constant 0 : index
    %c0_2 = arith.constant 0 : index
    %1 = vector.load %arg2[%c0_1, %c0_2] : memref<784x50xbf16, #tpu.memory_space<vmem>>, vector<784x50xbf16>
    %cst = arith.constant dense<0.000000e+00> : vector<8x50xf32>
    %2 = tpu.matmul %0, %1, %cst {dimension_numbers = #tpu.dot_dimension_numbers<[1], [0], [0], [1], [0, 0, 1, 1], [], []>} : vector<8x784xbf16>, vector<784x50xbf16>, vector<8x50xf32> -> vector<8x50xf32>
    %c0_3 = arith.constant 0 : index
    %c0_4 = arith.constant 0 : index
    %3 = vector.load %arg3[%c0_3, %c0_4] : memref<1x50xf32, #tpu.memory_space<vmem>>, vector<1x50xf32>
    %4 = vector.broadcast %3 : vector<1x50xf32> to vector<8x50xf32>
    %5 = arith.addf %2, %4 : vector<8x50xf32>
    %cst_5 = arith.constant 5.000000e-01 : f32
    %6 = vector.broadcast %cst_5 : f32 to vector<8x50xf32>
    %7 = arith.mulf %6, %5 : vector<8x50xf32>
    %8 = math.tanh %7 : vector<8x50xf32>
    %cst_6 = arith.constant 1.000000e+00 : f32
    %9 = vector.broadcast %cst_6 : f32 to vector<8x50xf32>
    %10 = arith.addf %8, %9 : vector<8x50xf32>
    %cst_7 = arith.constant 5.000000e-01 : f32
    %11 = vector.broadcast %cst_7 : f32 to vector<8x50xf32>
    %12 = arith.mulf %11, %10 : vector<8x50xf32>
    %13 = arith.truncf %12 : vector<8x50xf32> to vector<8x50xbf16>
    %c0_8 = arith.constant 0 : index
    %c0_9 = arith.constant 0 : index
    %14 = vector.load %arg4[%c0_8, %c0_9] : memref<50x100xbf16, #tpu.memory_space<vmem>>, vector<50x100xbf16>
    %cst_10 = arith.constant dense<0.000000e+00> : vector<8x100xf32>
    %15 = tpu.matmul %13, %14, %cst_10 {dimension_numbers = #tpu.dot_dimension_numbers<[1], [0], [0], [1], [0, 0, 1, 1], [], []>} : vector<8x50xbf16>, vector<50x100xbf16>, vector<8x100xf32> -> vector<8x100xf32>
    %c0_11 = arith.constant 0 : index
    %c0_12 = arith.constant 0 : index
    %16 = vector.load %arg5[%c0_11, %c0_12] : memref<1x100xf32, #tpu.memory_space<vmem>>, vector<1x100xf32>
    %17 = vector.broadcast %16 : vector<1x100xf32> to vector<8x100xf32>
    %18 = arith.addf %15, %17 : vector<8x100xf32>
    %cst_13 = arith.constant 5.000000e-01 : f32
    %19 = vector.broadcast %cst_13 : f32 to vector<8x100xf32>
    %20 = arith.mulf %19, %18 : vector<8x100xf32>
    %21 = math.tanh %20 : vector<8x100xf32>
    %cst_14 = arith.constant 1.000000e+00 : f32
    %22 = vector.broadcast %cst_14 : f32 to vector<8x100xf32>
    %23 = arith.addf %21, %22 : vector<8x100xf32>
    %cst_15 = arith.constant 5.000000e-01 : f32
    %24 = vector.broadcast %cst_15 : f32 to vector<8x100xf32>
    %25 = arith.mulf %24, %23 : vector<8x100xf32>
    %26 = arith.truncf %25 : vector<8x100xf32> to vector<8x100xbf16>
    %c0_16 = arith.constant 0 : index
    %c0_17 = arith.constant 0 : index
    %27 = vector.load %arg6[%c0_16, %c0_17] : memref<100x10xbf16, #tpu.memory_space<vmem>>, vector<100x10xbf16>
    %cst_18 = arith.constant dense<0.000000e+00> : vector<8x10xf32>
    %28 = tpu.matmul %26, %27, %cst_18 {dimension_numbers = #tpu.dot_dimension_numbers<[1], [0], [0], [1], [0, 0, 1, 1], [], []>} : vector<8x100xbf16>, vector<100x10xbf16>, vector<8x10xf32> -> vector<8x10xf32>
    %c0_19 = arith.constant 0 : index
    %c0_20 = arith.constant 0 : index
    %29 = vector.load %arg7[%c0_19, %c0_20] : memref<1x10xf32, #tpu.memory_space<vmem>>, vector<1x10xf32>
    %30 = vector.broadcast %29 : vector<1x10xf32> to vector<8x10xf32>
    %31 = arith.addf %28, %30 : vector<8x10xf32>
    %cst_21 = arith.constant dense<0xFF800000> : vector<8xf32>
    %32 = vector.multi_reduction <maximumf>, %31, %cst_21 [1] : vector<8x10xf32> to vector<8xf32>
    %33 = vector.shape_cast %32 : vector<8xf32> to vector<8x1xf32>
    %34 = vector.broadcast %33 : vector<8x1xf32> to vector<8x10xf32>
    %35 = arith.subf %31, %34 : vector<8x10xf32>
    %36 = math.exp %35 : vector<8x10xf32>
    %cst_22 = arith.constant dense<0.000000e+00> : vector<8xf32>
    %37 = vector.multi_reduction <add>, %36, %cst_22 [1] : vector<8x10xf32> to vector<8xf32>
    %38 = vector.shape_cast %37 : vector<8xf32> to vector<8x1xf32>
    %39 = tpu.reciprocal %38 : vector<8x1xf32> -> vector<8x1xf32>
    %40 = vector.broadcast %39 : vector<8x1xf32> to vector<8x10xf32>
    %41 = arith.mulf %36, %40 : vector<8x10xf32>
    %c0_23 = arith.constant 0 : index
    %c0_24 = arith.constant 0 : index
    %42 = vector.load %arg8[%c0_23, %c0_24] : memref<8x10xf32, #tpu.memory_space<vmem>>, vector<8x10xf32>
    tpu.vector_store %arg8[%c0_23, %c0_24], %41 {strides = array<i32>} : memref<8x10xf32, #tpu.memory_space<vmem>>, vector<8x10xf32>,
    return
  }
  func.func @transform_0(%arg0: i32) -> (i32, i32) {
    %c0_i32 = arith.constant 0 : i32
    %c0_i32_0 = arith.constant 0 : i32
    return %arg0, %c0_i32 : i32, i32
  }
  func.func @transform_1(%arg0: i32) -> (i32, i32) {
    %c0_i32 = arith.constant 0 : i32
    %c0_i32_0 = arith.constant 0 : i32
    %c0_i32_1 = arith.constant 0 : i32
    return %c0_i32, %c0_i32_0 : i32, i32
  }
  func.func @transform_2(%arg0: i32) -> (i32, i32) {
    %c0_i32 = arith.constant 0 : i32
    %c0_i32_0 = arith.constant 0 : i32
    %c0_i32_1 = arith.constant 0 : i32
    return %c0_i32, %c0_i32_0 : i32, i32
  }
  func.func @transform_3(%arg0: i32) -> (i32, i32) {
    %c0_i32 = arith.constant 0 : i32
    %c0_i32_0 = arith.constant 0 : i32
    %c0_i32_1 = arith.constant 0 : i32
    return %c0_i32, %c0_i32_0 : i32, i32
  }
  func.func @transform_4(%arg0: i32) -> (i32, i32) {
    %c0_i32 = arith.constant 0 : i32
    %c0_i32_0 = arith.constant 0 : i32
    %c0_i32_1 = arith.constant 0 : i32
    return %c0_i32, %c0_i32_0 : i32, i32
  }
  func.func @transform_5(%arg0: i32) -> (i32, i32) {
    %c0_i32 = arith.constant 0 : i32
    %c0_i32_0 = arith.constant 0 : i32
    %c0_i32_1 = arith.constant 0 : i32
    return %c0_i32, %c0_i32_0 : i32, i32
  }
  func.func @transform_6(%arg0: i32) -> (i32, i32) {
    %c0_i32 = arith.constant 0 : i32
    %c0_i32_0 = arith.constant 0 : i32
    %c0_i32_1 = arith.constant 0 : i32
    return %c0_i32, %c0_i32_0 : i32, i32
  }
  func.func @transform_7(%arg0: i32) -> (i32, i32) {
    %c0_i32 = arith.constant 0 : i32
    %c0_i32_0 = arith.constant 0 : i32
    return %arg0, %c0_i32 : i32, i32
  }
}

</mosaic_0001>

<llo_original>
// kernel: neuralnet_forward.1
$region0: #{neuralnet_forward.1}
  #allocation0 [shape = 'u32[]', space=smem, size = 0x4, offset = 0x4, fixed_abs, tag = 'smem constant byte address 0x4 - core index']
  #allocation1 [shape = 'u32[72,128]{1,0:T(1,128)}', space=vmem, size = 0x9000, scoped, tag = 'internal scratch']
  %s0 = inlined_call_operand.vmem [shape: bf16[8,784], index: 0, kind: input, shape index: {}]
  %s1 = inlined_call_operand.vmem [shape: bf16[784,50], index: 1, kind: input, shape index: {}]
  %s2 = inlined_call_operand.vmem [shape: f32[1,50], index: 2, kind: input, shape index: {}]
  %s3 = inlined_call_operand.vmem [shape: bf16[50,100], index: 3, kind: input, shape index: {}]
  %s4 = inlined_call_operand.vmem [shape: f32[1,100], index: 4, kind: input, shape index: {}]
  %s5 = inlined_call_operand.vmem [shape: bf16[100,10], index: 5, kind: input, shape index: {}]
  %s6 = inlined_call_operand.vmem [shape: f32[1,10], index: 6, kind: input, shape index: {}]
  %s7 = inlined_call_operand.hbm [shape: f32[8,10], index: 7, kind: output, shape index: {}]
  %s8 = sld [smem:[#allocation0]]
  $region38: #{neuralnet_forward.1} parent=0
    _
  %s10 = ssub.s32 1, %s8
  %s11 = scalar_select 0, %s10, %s8
  $region1: #{neuralnet_forward.1} parent=0
    #allocation2 [shape = 'u8[4096]{0}', space=vmem, size = 0x1000, scoped, tag = 'output window, operand 0, single buffered']
    #allocation3 [shape = 's32[1]{0}', space=sflag, size = 0x4, scoped, tag = 'scoped memory for neuralnet_forward.1']
    %12 = vsyncpa [#allocation3], 0
    // Predicated region
    $region2: #{neuralnet_forward.1} parent=1 // pred_check
      _
    $region3: #{neuralnet_forward.1} parent=1 // pred_check_branch
      %14 = sbr.rel (0) target = $region5
    $region4: #{neuralnet_forward.1} parent=1 // pred_region
      _
    $region5: #{neuralnet_forward.1} parent=1 // pred_fallthru
      _
    // Predicated region
    $region6: #{neuralnet_forward.1} parent=1 // pred_check
      _
    $region7: #{neuralnet_forward.1} parent=1 // pred_check_branch
      %16 = sbr.rel (0) target = $region9
    $region8: #{neuralnet_forward.1} parent=1 // pred_region
      _
    $region9: #{neuralnet_forward.1} parent=1 // pred_fallthru
      _
    // Predicated region
    $region10: #{neuralnet_forward.1} parent=1 // pred_check
      _
    $region11: #{neuralnet_forward.1} parent=1 // pred_check_branch
      %18 = sbr.rel (0) target = $region13
    $region12: #{neuralnet_forward.1} parent=1 // pred_region
      _
    $region13: #{neuralnet_forward.1} parent=1 // pred_fallthru
      _
    // Predicated region
    $region14: #{neuralnet_forward.1} parent=1 // pred_check
      _
    $region15: #{neuralnet_forward.1} parent=1 // pred_check_branch
      %20 = sbr.rel (0) target = $region17
    $region16: #{neuralnet_forward.1} parent=1 // pred_region
      _
    $region17: #{neuralnet_forward.1} parent=1 // pred_fallthru
      _
    // Predicated region
    $region18: #{neuralnet_forward.1} parent=1 // pred_check
      _
    $region19: #{neuralnet_forward.1} parent=1 // pred_check_branch
      %22 = sbr.rel (0) target = $region21
    $region20: #{neuralnet_forward.1} parent=1 // pred_region
      _
    $region21: #{neuralnet_forward.1} parent=1 // pred_fallthru
      _
    // Predicated region
    $region22: #{neuralnet_forward.1} parent=1 // pred_check
      _
    $region23: #{neuralnet_forward.1} parent=1 // pred_check_branch
      %24 = sbr.rel (0) target = $region25
    $region24: #{neuralnet_forward.1} parent=1 // pred_region
      _
    $region25: #{neuralnet_forward.1} parent=1 // pred_fallthru
      _
    // Predicated region
    $region26: #{neuralnet_forward.1} parent=1 // pred_check
      _
    $region27: #{neuralnet_forward.1} parent=1 // pred_check_branch
      %26 = sbr.rel (0) target = $region29
    $region28: #{neuralnet_forward.1} parent=1 // pred_region
      _
    $region29: #{neuralnet_forward.1} parent=1 // pred_fallthru
      _
    %v28 = vld [vmem:[%s0] sm:$0xff]
    %v29 = vld [vmem:[%s0 + $0x8] sm:$0xff]
    %v30 = vld [vmem:[%s0 + $0x10] sm:$0xff]
    %v31 = vld [vmem:[%s0 + $0x18] sm:$0xf]
    %v32 = vld [vmem:[%s1] sm:$0xf]
    %v33 = vld [vmem:[%s1 + $0x4] sm:$0xf]
    %v34 = vld [vmem:[%s1 + $0x8] sm:$0xf]
    %v35 = vld [vmem:[%s1 + $0xc] sm:$0xf]
    %v36 = vld [vmem:[%s1 + $0x10] sm:$0xf]
    %v37 = vld [vmem:[%s1 + $0x14] sm:$0xf]
    %v38 = vld [vmem:[%s1 + $0x18] sm:$0xf]
    %v39 = vld [vmem:[%s1 + $0x1c] sm:$0xf]
    %v40 = vld [vmem:[%s1 + $0x20] sm:$0xf]
    %v41 = vld [vmem:[%s1 + $0x24] sm:$0xf]
    %v42 = vld [vmem:[%s1 + $0x28] sm:$0xf]
    %v43 = vld [vmem:[%s1 + $0x2c] sm:$0xf]
    %v44 = vld [vmem:[%s1 + $0x30] sm:$0xf]
    %v45 = vld [vmem:[%s1 + $0x34] sm:$0xf]
    %v46 = vld [vmem:[%s1 + $0x38] sm:$0xf]
    %v47 = vld [vmem:[%s1 + $0x3c] sm:$0xf]
    %v48 = vld [vmem:[%s1 + $0x40] sm:$0xf]
    %v49 = vld [vmem:[%s1 + $0x44] sm:$0xf]
    %v50 = vld [vmem:[%s1 + $0x48] sm:$0xf]
    %v51 = vld [vmem:[%s1 + $0x4c] sm:$0xf]
    %v52 = vld [vmem:[%s1 + $0x50] sm:$0xf]
    %v53 = vld [vmem:[%s1 + $0x54] sm:$0xf]
    %v54 = vld [vmem:[%s1 + $0x58] sm:$0xf]
    %v55 = vld [vmem:[%s1 + $0x5c] sm:$0xf]
    %v56 = vld [vmem:[%s1 + $0x60] sm:$0xf]
    %v57 = vld [vmem:[%s1 + $0x64] sm:$0xf]
    %v58 = vld [vmem:[%s1 + $0x68] sm:$0xf]
    %v59 = vld [vmem:[%s1 + $0x6c] sm:$0xf]
    %v60 = vld [vmem:[%s1 + $0x70] sm:$0xf]
    %v61 = vld [vmem:[%s1 + $0x74] sm:$0xf]
    %v62 = vld [vmem:[%s1 + $0x78] sm:$0xf]
    %v63 = vld [vmem:[%s1 + $0x7c] sm:$0xf]
    %v64 = vld [vmem:[%s1 + $0x80] sm:$0xf]
    %v65 = vld [vmem:[%s1 + $0x84] sm:$0xf]
    %v66 = vld [vmem:[%s1 + $0x88] sm:$0xf]
    %v67 = vld [vmem:[%s1 + $0x8c] sm:$0xf]
    %v68 = vld [vmem:[%s1 + $0x90] sm:$0xf]
    %v69 = vld [vmem:[%s1 + $0x94] sm:$0xf]
    %v70 = vld [vmem:[%s1 + $0x98] sm:$0xf]
    %v71 = vld [vmem:[%s1 + $0x9c] sm:$0xf]
    %v72 = vld [vmem:[%s1 + $0xa0] sm:$0xf]
    %v73 = vld [vmem:[%s1 + $0xa4] sm:$0xf]
    %v74 = vld [vmem:[%s1 + $0xa8] sm:$0xf]
    %v75 = vld [vmem:[%s1 + $0xac] sm:$0xf]
    %v76 = vld [vmem:[%s1 + $0xb0] sm:$0xf]
    %v77 = vld [vmem:[%s1 + $0xb4] sm:$0xf]
    %v78 = vld [vmem:[%s1 + $0xb8] sm:$0xf]
    %v79 = vld [vmem:[%s1 + $0xbc] sm:$0xf]
    %v80 = vld [vmem:[%s1 + $0xc0] sm:$0xf]
    %v81 = vld [vmem:[%s1 + $0xc4] sm:$0xf]
    %v82 = vld [vmem:[%s1 + $0xc8] sm:$0xf]
    %v83 = vld [vmem:[%s1 + $0xcc] sm:$0xf]
    %v84 = vld [vmem:[%s1 + $0xd0] sm:$0xf]
    %v85 = vld [vmem:[%s1 + $0xd4] sm:$0xf]
    %v86 = vld [vmem:[%s1 + $0xd8] sm:$0xf]
    %v87 = vld [vmem:[%s1 + $0xdc] sm:$0xf]
    %v88 = vld [vmem:[%s1 + $0xe0] sm:$0xf]
    %v89 = vld [vmem:[%s1 + $0xe4] sm:$0xf]
    %v90 = vld [vmem:[%s1 + $0xe8] sm:$0xf]
    %v91 = vld [vmem:[%s1 + $0xec] sm:$0xf]
    %v92 = vld [vmem:[%s1 + $0xf0] sm:$0xf]
    %v93 = vld [vmem:[%s1 + $0xf4] sm:$0xf]
    %v94 = vld [vmem:[%s1 + $0xf8] sm:$0xf]
    %v95 = vld [vmem:[%s1 + $0xfc] sm:$0xf]
    %v96 = vld [vmem:[%s1 + $0x100] sm:$0xf]
    %v97 = vld [vmem:[%s1 + $0x104] sm:$0xf]
    %v98 = vld [vmem:[%s1 + $0x108] sm:$0xf]
    %v99 = vld [vmem:[%s1 + $0x10c] sm:$0xf]
    %v100 = vld [vmem:[%s1 + $0x110] sm:$0xf]
    %v101 = vld [vmem:[%s1 + $0x114] sm:$0xf]
    %v102 = vld [vmem:[%s1 + $0x118] sm:$0xf]
    %v103 = vld [vmem:[%s1 + $0x11c] sm:$0xf]
    %v104 = vld [vmem:[%s1 + $0x120] sm:$0xf]
    %v105 = vld [vmem:[%s1 + $0x124] sm:$0xf]
    %v106 = vld [vmem:[%s1 + $0x128] sm:$0xf]
    %v107 = vld [vmem:[%s1 + $0x12c] sm:$0xf]
    %v108 = vld [vmem:[%s1 + $0x130] sm:$0xf]
    %v109 = vld [vmem:[%s1 + $0x134] sm:$0xf]
    %v110 = vld [vmem:[%s1 + $0x138] sm:$0xf]
    %v111 = vld [vmem:[%s1 + $0x13c] sm:$0xf]
    %v112 = vld [vmem:[%s1 + $0x140] sm:$0xf]
    %v113 = vld [vmem:[%s1 + $0x144] sm:$0xf]
    %v114 = vld [vmem:[%s1 + $0x148] sm:$0xf]
    %v115 = vld [vmem:[%s1 + $0x14c] sm:$0xf]
    %v116 = vld [vmem:[%s1 + $0x150] sm:$0xf]
    %v117 = vld [vmem:[%s1 + $0x154] sm:$0xf]
    %v118 = vld [vmem:[%s1 + $0x158] sm:$0xf]
    %v119 = vld [vmem:[%s1 + $0x15c] sm:$0xf]
    %v120 = vld [vmem:[%s1 + $0x160] sm:$0xf]
    %v121 = vld [vmem:[%s1 + $0x164] sm:$0xf]
    %v122 = vld [vmem:[%s1 + $0x168] sm:$0xf]
    %v123 = vld [vmem:[%s1 + $0x16c] sm:$0xf]
    %v124 = vld [vmem:[%s1 + $0x170] sm:$0xf]
    %v125 = vld [vmem:[%s1 + $0x174] sm:$0xf]
    %v126 = vld [vmem:[%s1 + $0x178] sm:$0xf]
    %v127 = vld [vmem:[%s1 + $0x17c] sm:$0xf]
    %v128 = vld [vmem:[%s1 + $0x180] sm:$0xf]
    %v129 = vld [vmem:[%s1 + $0x184] sm:$0xf]
    %v130 = vld [vmem:[%s2] sm:$0x1]
    %v132 = vperm.slane %v130, 0
    %v138 = vunpack.c.l.b16 %v28
    %v139 = vunpack.c.h.b16 %v28
    %v140 = vunpack.c.l.b16 %v29
    %v141 = vunpack.c.h.b16 %v29
    %v142 = vunpack.c.l.b16 %v30
    %v143 = vunpack.c.h.b16 %v30
    %v144 = vunpack.c.l.b16 %v31
    %v145 = vpack.c.b16 %v138, %v138
    %v146 = vpack.c.b16 %v139, %v139
    %v147 = vpack.c.b16 %v140, %v140
    %v148 = vpack.c.b16 %v141, %v141
    %v149 = vpack.c.b16 %v142, %v142
    %v150 = vpack.c.b16 %v143, %v143
    %v151 = vpack.c.b16 %v144, %v144
    %v256 = vunpack.c.l.b16 %v32
    %v257 = vunpack.c.l.b16 %v33
    %v258 = vunpack.c.l.b16 %v34
    %v259 = vunpack.c.l.b16 %v35
    %v260 = vunpack.c.l.b16 %v36
    %v261 = vunpack.c.l.b16 %v37
    %v262 = vunpack.c.l.b16 %v38
    %v263 = vunpack.c.l.b16 %v39
    %v264 = vunpack.c.l.b16 %v40
    %v265 = vunpack.c.l.b16 %v41
    %v266 = vunpack.c.l.b16 %v42
    %v267 = vunpack.c.l.b16 %v43
    %v268 = vunpack.c.l.b16 %v44
    %v269 = vunpack.c.l.b16 %v45
    %v270 = vunpack.c.l.b16 %v46
    %v271 = vunpack.c.l.b16 %v47
    %v272 = vunpack.c.l.b16 %v48
    %v273 = vunpack.c.l.b16 %v49
    %v274 = vunpack.c.l.b16 %v50
    %v275 = vunpack.c.l.b16 %v51
    %v276 = vunpack.c.l.b16 %v52
    %v277 = vunpack.c.l.b16 %v53
    %v278 = vunpack.c.l.b16 %v54
    %v279 = vunpack.c.l.b16 %v55
    %v280 = vunpack.c.l.b16 %v56
    %v281 = vunpack.c.l.b16 %v57
    %v282 = vunpack.c.l.b16 %v58
    %v283 = vunpack.c.l.b16 %v59
    %v284 = vunpack.c.l.b16 %v60
    %v285 = vunpack.c.l.b16 %v61
    %v286 = vunpack.c.l.b16 %v62
    %v287 = vunpack.c.l.b16 %v63
    %v288 = vunpack.c.l.b16 %v64
    %v289 = vunpack.c.l.b16 %v65
    %v290 = vunpack.c.l.b16 %v66
    %v291 = vunpack.c.l.b16 %v67
    %v292 = vunpack.c.l.b16 %v68
    %v293 = vunpack.c.l.b16 %v69
    %v294 = vunpack.c.l.b16 %v70
    %v295 = vunpack.c.l.b16 %v71
    %v296 = vunpack.c.l.b16 %v72
    %v297 = vunpack.c.l.b16 %v73
    %v298 = vunpack.c.l.b16 %v74
    %v299 = vunpack.c.l.b16 %v75
    %v300 = vunpack.c.l.b16 %v76
    %v301 = vunpack.c.l.b16 %v77
    %v302 = vunpack.c.l.b16 %v78
    %v303 = vunpack.c.l.b16 %v79
    %v304 = vunpack.c.l.b16 %v80
    %v305 = vunpack.c.l.b16 %v81
    %v306 = vunpack.c.l.b16 %v82
    %v307 = vunpack.c.l.b16 %v83
    %v308 = vunpack.c.l.b16 %v84
    %v309 = vunpack.c.l.b16 %v85
    %v310 = vunpack.c.l.b16 %v86
    %v311 = vunpack.c.l.b16 %v87
    %v312 = vunpack.c.l.b16 %v88
    %v313 = vunpack.c.l.b16 %v89
    %v314 = vunpack.c.l.b16 %v90
    %v315 = vunpack.c.l.b16 %v91
    %v316 = vunpack.c.l.b16 %v92
    %v317 = vunpack.c.l.b16 %v93
    %v318 = vunpack.c.l.b16 %v94
    %v319 = vunpack.c.l.b16 %v95
    %v320 = vunpack.c.l.b16 %v96
    %v321 = vunpack.c.l.b16 %v97
    %v322 = vunpack.c.l.b16 %v98
    %v323 = vunpack.c.l.b16 %v99
    %v324 = vunpack.c.l.b16 %v100
    %v325 = vunpack.c.l.b16 %v101
    %v326 = vunpack.c.l.b16 %v102
    %v327 = vunpack.c.l.b16 %v103
    %v328 = vunpack.c.l.b16 %v104
    %v329 = vunpack.c.l.b16 %v105
    %v330 = vunpack.c.l.b16 %v106
    %v331 = vunpack.c.l.b16 %v107
    %v332 = vunpack.c.l.b16 %v108
    %v333 = vunpack.c.l.b16 %v109
    %v334 = vunpack.c.l.b16 %v110
    %v335 = vunpack.c.l.b16 %v111
    %v336 = vunpack.c.l.b16 %v112
    %v337 = vunpack.c.l.b16 %v113
    %v338 = vunpack.c.l.b16 %v114
    %v339 = vunpack.c.l.b16 %v115
    %v340 = vunpack.c.l.b16 %v116
    %v341 = vunpack.c.l.b16 %v117
    %v342 = vunpack.c.l.b16 %v118
    %v343 = vunpack.c.l.b16 %v119
    %v344 = vunpack.c.l.b16 %v120
    %v345 = vunpack.c.l.b16 %v121
    %v346 = vunpack.c.l.b16 %v122
    %v347 = vunpack.c.l.b16 %v123
    %v348 = vunpack.c.l.b16 %v124
    %v349 = vunpack.c.l.b16 %v125
    %v350 = vunpack.c.l.b16 %v126
    %v351 = vunpack.c.l.b16 %v127
    %v352 = vunpack.c.l.b16 %v128
    %v353 = vunpack.c.l.b16 %v129
    %v354 = vpack.c.b16 %v257, %v256
    %v355 = vpack.c.b16 %v259, %v258
    %v356 = vpack.c.b16 %v261, %v260
    %v357 = vpack.c.b16 %v263, %v262
    %v358 = vpack.c.b16 %v265, %v264
    %v359 = vpack.c.b16 %v267, %v266
    %v360 = vpack.c.b16 %v269, %v268
    %v361 = vpack.c.b16 %v271, %v270
    %v362 = vpack.c.b16 %v273, %v272
    %v363 = vpack.c.b16 %v275, %v274
    %v364 = vpack.c.b16 %v277, %v276
    %v365 = vpack.c.b16 %v279, %v278
    %v366 = vpack.c.b16 %v281, %v280
    %v367 = vpack.c.b16 %v283, %v282
    %v368 = vpack.c.b16 %v285, %v284
    %v369 = vpack.c.b16 %v287, %v286
    %v370 = vpack.c.b16 %v289, %v288
    %v371 = vpack.c.b16 %v291, %v290
    %v372 = vpack.c.b16 %v293, %v292
    %v373 = vpack.c.b16 %v295, %v294
    %v374 = vpack.c.b16 %v297, %v296
    %v375 = vpack.c.b16 %v299, %v298
    %v376 = vpack.c.b16 %v301, %v300
    %v377 = vpack.c.b16 %v303, %v302
    %v378 = vpack.c.b16 %v305, %v304
    %v379 = vpack.c.b16 %v307, %v306
    %v380 = vpack.c.b16 %v309, %v308
    %v381 = vpack.c.b16 %v311, %v310
    %v382 = vpack.c.b16 %v313, %v312
    %v383 = vpack.c.b16 %v315, %v314
    %v384 = vpack.c.b16 %v317, %v316
    %v385 = vpack.c.b16 %v319, %v318
    %v386 = vpack.c.b16 %v321, %v320
    %v387 = vpack.c.b16 %v323, %v322
    %v388 = vpack.c.b16 %v325, %v324
    %v389 = vpack.c.b16 %v327, %v326
    %v390 = vpack.c.b16 %v329, %v328
    %v391 = vpack.c.b16 %v331, %v330
    %v392 = vpack.c.b16 %v333, %v332
    %v393 = vpack.c.b16 %v335, %v334
    %v394 = vpack.c.b16 %v337, %v336
    %v395 = vpack.c.b16 %v339, %v338
    %v396 = vpack.c.b16 %v341, %v340
    %v397 = vpack.c.b16 %v343, %v342
    %v398 = vpack.c.b16 %v345, %v344
    %v399 = vpack.c.b16 %v347, %v346
    %v400 = vpack.c.b16 %v349, %v348
    %v401 = vpack.c.b16 %v351, %v350
    %v402 = vpack.c.b16 %v353, %v352
    %vm452 = vcmask 130048
    %v454 = vsel %vm452, %v151, 0
    %456 = vmatpush.bf16.msra.mxu0 %v361
    %457 = vmatpush.bf16.msra.mxu0 %v360
    %458 = vmatpush.bf16.msra.mxu0 %v359
    %459 = vmatpush.bf16.msra.mxu0 %v358
    %460 = vmatpush.bf16.msra.mxu0 %v357
    %461 = vmatpush.bf16.msra.mxu0 %v356
    %462 = vmatpush.bf16.msra.mxu0 %v355
    %463 = vmatpush.bf16.msra.mxu0 %v354
    %464 = vmatmul.bf16.gmra.mxu0 %v145
    %v465 = vpop.f32.mrf.mxu0
    %v466 = vadd.f32 %v132, %v465
    %v467 = vpop.f32.mrf.mxu0
    %468 = vdwg.mxu0
    %469 = vmatpush.bf16.msra.mxu0 %v369
    %470 = vmatpush.bf16.msra.mxu0 %v368
    %471 = vmatpush.bf16.msra.mxu0 %v367
    %472 = vmatpush.bf16.msra.mxu0 %v366
    %473 = vmatpush.bf16.msra.mxu0 %v365
    %474 = vmatpush.bf16.msra.mxu0 %v364
    %475 = vmatpush.bf16.msra.mxu0 %v363
    %476 = vmatpush.bf16.msra.mxu0 %v362
    %477 = vmatmul.bf16.gmra.mxu0 %v146
    %v478 = vpop.f32.mrf.mxu0
    %v479 = vadd.f32 %v466, %v478
    %v480 = vpop.f32.mrf.mxu0
    %481 = vdwg.mxu0
    %482 = vmatpush.bf16.msra.mxu0 %v377
    %483 = vmatpush.bf16.msra.mxu0 %v376
    %484 = vmatpush.bf16.msra.mxu0 %v375
    %485 = vmatpush.bf16.msra.mxu0 %v374
    %486 = vmatpush.bf16.msra.mxu0 %v373
    %487 = vmatpush.bf16.msra.mxu0 %v372
    %488 = vmatpush.bf16.msra.mxu0 %v371
    %489 = vmatpush.bf16.msra.mxu0 %v370
    %490 = vmatmul.bf16.gmra.mxu0 %v147
    %v491 = vpop.f32.mrf.mxu0
    %v492 = vadd.f32 %v479, %v491
    %v493 = vpop.f32.mrf.mxu0
    %494 = vdwg.mxu0
    %495 = vmatpush.bf16.msra.mxu0 %v385
    %496 = vmatpush.bf16.msra.mxu0 %v384
    %497 = vmatpush.bf16.msra.mxu0 %v383
    %498 = vmatpush.bf16.msra.mxu0 %v382
    %499 = vmatpush.bf16.msra.mxu0 %v381
    %500 = vmatpush.bf16.msra.mxu0 %v380
    %501 = vmatpush.bf16.msra.mxu0 %v379
    %502 = vmatpush.bf16.msra.mxu0 %v378
    %503 = vmatmul.bf16.gmra.mxu0 %v148
    %v504 = vpop.f32.mrf.mxu0
    %v505 = vadd.f32 %v492, %v504
    %v506 = vpop.f32.mrf.mxu0
    %507 = vdwg.mxu0
    %508 = vmatpush.bf16.msra.mxu0 %v393
    %509 = vmatpush.bf16.msra.mxu0 %v392
    %510 = vmatpush.bf16.msra.mxu0 %v391
    %511 = vmatpush.bf16.msra.mxu0 %v390
    %512 = vmatpush.bf16.msra.mxu0 %v389
    %513 = vmatpush.bf16.msra.mxu0 %v388
    %514 = vmatpush.bf16.msra.mxu0 %v387
    %515 = vmatpush.bf16.msra.mxu0 %v386
    %516 = vmatmul.bf16.gmra.mxu0 %v149
    %v517 = vpop.f32.mrf.mxu0
    %v518 = vadd.f32 %v505, %v517
    %v519 = vpop.f32.mrf.mxu0
    %520 = vdwg.mxu0
    %521 = vmatpush.bf16.msra.mxu0 %v401
    %522 = vmatpush.bf16.msra.mxu0 %v400
    %523 = vmatpush.bf16.msra.mxu0 %v399
    %524 = vmatpush.bf16.msra.mxu0 %v398
    %525 = vmatpush.bf16.msra.mxu0 %v397
    %526 = vmatpush.bf16.msra.mxu0 %v396
    %527 = vmatpush.bf16.msra.mxu0 %v395
    %528 = vmatpush.bf16.msra.mxu0 %v394
    %529 = vmatmul.bf16.gmra.mxu0 %v150
    %v530 = vpop.f32.mrf.mxu0
    %v531 = vadd.f32 %v518, %v530
    %v532 = vpop.f32.mrf.mxu0
    %533 = vdwg.mxu0
    %534 = vmatpush.bf16.msra.mxu0 0
    %535 = vmatpush.bf16.msra.mxu0 0
    %536 = vmatpush.bf16.msra.mxu0 0
    %537 = vmatpush.bf16.msra.mxu0 0
    %538 = vmatpush.bf16.msra.mxu0 0
    %539 = vmatpush.bf16.msra.mxu0 0
    %540 = vmatpush.bf16.msra.mxu0 0
    %541 = vmatpush.bf16.msra.mxu0 %v402
    %542 = vmatmul.bf16.gmra.mxu0 %v454
    %v543 = vpop.f32.mrf.mxu0
    %v544 = vadd.f32 %v531, %v543
    %v545 = vpop.f32.mrf.mxu0
    %546 = vdwg.mxu0
    %v547 = vmul.f32 %v544, 0.5
    %v548 = vtanh.pop %v547
    %v549 = vadd.f32 %v548, 1.0
    %v550 = vmul.f32 %v549, 0.5
    %v551 = vpack.c.bf16 %v550, %v550
    %v552 = vld [vmem:[%s3] sm:$0xf]
    %v553 = vld [vmem:[%s3 + $0x4] sm:$0xf]
    %v554 = vld [vmem:[%s3 + $0x8] sm:$0xf]
    %v555 = vld [vmem:[%s3 + $0xc] sm:$0xf]
    %v556 = vld [vmem:[%s3 + $0x10] sm:$0xf]
    %v557 = vld [vmem:[%s3 + $0x14] sm:$0xf]
    %v558 = vld [vmem:[%s3 + $0x18] sm:$0x1]
    %v559 = vld [vmem:[%s4] sm:$0x1]
    %v561 = vperm.slane %v559, 0
    %v570 = vunpack.c.l.b16 %v552
    %v571 = vunpack.c.l.b16 %v553
    %v572 = vunpack.c.l.b16 %v554
    %v573 = vunpack.c.l.b16 %v555
    %v574 = vunpack.c.l.b16 %v556
    %v575 = vunpack.c.l.b16 %v557
    %v576 = vunpack.c.l.b16 %v558
    %v577 = vpack.c.b16 %v571, %v570
    %v578 = vpack.c.b16 %v573, %v572
    %v579 = vpack.c.b16 %v575, %v574
    %v580 = vpack.c.b16 %v576, %v576
    %vm584 = vcmask 408576
    %v586 = vsel %vm584, %v551, 0
    %vm588 = vcmask 1040384
    %v590 = vsel %vm588, %v580, 0
    %592 = vmatpush.bf16.msra.mxu0 0
    %593 = vmatpush.bf16.msra.mxu0 0
    %594 = vmatpush.bf16.msra.mxu0 0
    %595 = vmatpush.bf16.msra.mxu0 0
    %596 = vmatpush.bf16.msra.mxu0 %v590
    %597 = vmatpush.bf16.msra.mxu0 %v579
    %598 = vmatpush.bf16.msra.mxu0 %v578
    %599 = vmatpush.bf16.msra.mxu0 %v577
    %600 = vmatmul.bf16.gmra.mxu0 %v586
    %v601 = vpop.f32.mrf.mxu0
    %v602 = vadd.f32 %v561, %v601
    %v603 = vpop.f32.mrf.mxu0
    %604 = vdwg.mxu0
    %v605 = vmul.f32 %v602, 0.5
    %v606 = vtanh.pop %v605
    %v607 = vadd.f32 %v606, 1.0
    %v608 = vmul.f32 %v607, 0.5
    %v609 = vpack.c.bf16 %v608, %v608
    %v610 = vld [vmem:[%s5] sm:$0xf]
    %v611 = vld [vmem:[%s5 + $0x4] sm:$0xf]
    %v612 = vld [vmem:[%s5 + $0x8] sm:$0xf]
    %v613 = vld [vmem:[%s5 + $0xc] sm:$0xf]
    %v614 = vld [vmem:[%s5 + $0x10] sm:$0xf]
    %v615 = vld [vmem:[%s5 + $0x14] sm:$0xf]
    %v616 = vld [vmem:[%s5 + $0x18] sm:$0xf]
    %v617 = vld [vmem:[%s5 + $0x1c] sm:$0xf]
    %v618 = vld [vmem:[%s5 + $0x20] sm:$0xf]
    %v619 = vld [vmem:[%s5 + $0x24] sm:$0xf]
    %v620 = vld [vmem:[%s5 + $0x28] sm:$0xf]
    %v621 = vld [vmem:[%s5 + $0x2c] sm:$0xf]
    %v622 = vld [vmem:[%s5 + $0x30] sm:$0x3]
    %v623 = vld [vmem:[%s6] sm:$0x1]
    %v625 = vperm.slane %v623, 0
    %v640 = vunpack.c.l.b16 %v610
    %v641 = vunpack.c.l.b16 %v611
    %v642 = vunpack.c.l.b16 %v612
    %v643 = vunpack.c.l.b16 %v613
    %v644 = vunpack.c.l.b16 %v614
    %v645 = vunpack.c.l.b16 %v615
    %v646 = vunpack.c.l.b16 %v616
    %v647 = vunpack.c.l.b16 %v617
    %v648 = vunpack.c.l.b16 %v618
    %v649 = vunpack.c.l.b16 %v619
    %v650 = vunpack.c.l.b16 %v620
    %v651 = vunpack.c.l.b16 %v621
    %v652 = vunpack.c.l.b16 %v622
    %v653 = vpack.c.b16 %v641, %v640
    %v654 = vpack.c.b16 %v643, %v642
    %v655 = vpack.c.b16 %v645, %v644
    %v656 = vpack.c.b16 %v647, %v646
    %v657 = vpack.c.b16 %v649, %v648
    %v658 = vpack.c.b16 %v651, %v650
    %v659 = vpack.c.b16 %v652, %v652
    %vm666 = vcmask 818176
    %v668 = vsel %vm666, %v609, 0
    %vm670 = vcmask 1041408
    %v672 = vsel %vm670, %v659, 0
    %674 = vmatpush.bf16.msra.mxu0 0
    %675 = vmatpush.bf16.msra.mxu0 %v672
    %676 = vmatpush.bf16.msra.mxu0 %v658
    %677 = vmatpush.bf16.msra.mxu0 %v657
    %678 = vmatpush.bf16.msra.mxu0 %v656
    %679 = vmatpush.bf16.msra.mxu0 %v655
    %680 = vmatpush.bf16.msra.mxu0 %v654
    %681 = vmatpush.bf16.msra.mxu0 %v653
    %682 = vmatmul.bf16.gmra.mxu0 %v668
    %v683 = vpop.f32.mrf.mxu0
    %v684 = vadd.f32 %v625, %v683
    %v685 = vpop.f32.mrf.mxu0
    %686 = vdwg.mxu0
    %vm687 = vcmask 80896
    %v688 = vsel %vm687, %v684, -inf
    %689 = vmax.xlane.f32.xlu0 %v688
    %v690 = vpop.xlane.xlu0 %689
    %v691 = vsub.f32 %v684, %v690
    %v692 = vmul.f32 %v691, 1.442695
    %v693 = vpow.pop %v692
    %v694 = vsel %vm687, %v693, 0.0
    %695 = vadd.xlane.f32.xlu0 %v694
    %v696 = vpop.xlane.xlu0 %695
    %v697 = vrcp.pop %v696
    %v698 = vmul.f32 %v696, %v697
    %v699 = vsub.f32 1.0, %v698
    %v700 = vmul.f32 %v697, %v699
    %v701 = vadd.f32 %v697, %v700
    %vm702 = vweird.f32 %v696
    %vm703 = vweird.f32 %v697
    %vm704 = vmor %vm702, %vm703
    %v705 = vsel %vm704, %v697, %v701
    %v706 = vand.u32 2147483647, %v696
    %vm707 = vcmp.eq.f32.partialorder %v706, 8.507059e+37
    %v708 = vand.u32 %v696, 2147483648
    %v709 = vor.u32 1.1754944e-38, %v708
    %v710 = vsel %vm707, %v709, %v705
    %v711 = vmul.f32 %v693, %v710
    %712 = vst.msk [vmem:[#allocation2] sm:$0xff] %vm687, %v711
    // Predicated region
    $region30: #{neuralnet_forward.1} parent=1 // pred_check
      _
    $region31: #{neuralnet_forward.1} parent=1 // pred_check_branch
      %714 = sbr.rel (0) target = $region33
    $region32: #{neuralnet_forward.1} parent=1 // pred_region
      %716 = vsyncadd [#allocation3], 0
      %s718 = sshll.u32 [#allocation2], 4
      %s719 = int_to_ptr.vmem [resolvable:$true] %s718
      %s720 = sshll.u32 %s7, 4
      %s721 = int_to_ptr.hbm [resolvable:$true] %s720
      %723 = dma.vmem_to_hbm [thread:$0]  %s719, 128, %s721, [#allocation3]
    $region33: #{neuralnet_forward.1} parent=1 // pred_fallthru
      _
    // Predicated region
    $region34: #{neuralnet_forward.1} parent=1 // pred_check
      _
    $region35: #{neuralnet_forward.1} parent=1 // pred_check_branch
      %725 = sbr.rel (0) target = $region37
    $region36: #{neuralnet_forward.1} parent=1 // pred_region
      %727 = dma.done [#allocation3], 128
    $region37: #{neuralnet_forward.1} parent=1 // pred_fallthru
      _
    %728 = vsyncpa [#allocation3], 1

</llo_original>
